<compile_context>
chip_gen: v7x
topology: tpu7x:2x2x1
jax: 0.10.0
libtpu: 0.0.40
codegen_flags: <defaults>
</compile_context>

<pallas_src>
import jax
import jax.numpy as jnp
from jax.experimental import pallas as pl
from jax.experimental.pallas import tpu as pltpu

INPUT_LENGTH = 64
LANES = 128
TARGET_TILE_BYTES = 2 * 1024 * 1024  # per-buffer ceiling (safe on v5e/v6e/v7x)


def _abs_kernel(x_ref, o_ref):
    # Elementwise absolute value on the whole VMEM tile (VPU op).
    o_ref[...] = jnp.abs(x_ref[...])


def _round_up(n, m):
    return ((n + m - 1) // m) * m


def _abs_pallas_2d(x2d, tile_rows):
    rows, lanes = x2d.shape
    itemsize = jnp.dtype(x2d.dtype).itemsize
    grid = (pl.cdiv(rows, tile_rows),)
    return pl.pallas_call(
        _abs_kernel,
        out_shape=jax.ShapeDtypeStruct((rows, lanes), x2d.dtype),
        grid=grid,
        in_specs=[pl.BlockSpec((tile_rows, lanes), lambda i: (i, 0))],
        out_specs=pl.BlockSpec((tile_rows, lanes), lambda i: (i, 0)),
        compiler_params=pltpu.CompilerParams(
            dimension_semantics=("parallel",)),
        cost_estimate=pl.CostEstimate(
            flops=rows * lanes,
            transcendentals=0,
            bytes_accessed=2 * rows * lanes * itemsize),
    )(x2d)


@jax.jit
def _ullu_forward_impl(x):
    total = x.size
    if total == 0:
        return x

    itemsize = jnp.dtype(x.dtype).itemsize
    # Sublane packing: 8 rows for 4-byte dtypes, 16 for 2-byte, 32 for 1-byte.
    sublanes = 8 * max(1, 4 // itemsize)

    if total % LANES != 0:
        # Ragged size: pad + slice would add full extra HBM passes that dwarf
        # any in-kernel gain on this mem-bound op; let XLA fuse a plain abs.
        return jnp.abs(x)

    rows = total // LANES
    x2d = x.reshape(rows, LANES)  # free bitcast under jit

    if rows <= sublanes:
        # Tiny input: one block equal to the full array dims (allowed even if
        # rows is not a multiple of the sublane tile).
        tile_rows = rows
    else:
        # Largest sublane-aligned tile whose buffer stays <= TARGET_TILE_BYTES.
        max_tile_rows = max(
            sublanes,
            (TARGET_TILE_BYTES // (LANES * itemsize)) // sublanes * sublanes)
        # Aim for ~8 grid steps so the pipeline double-buffers and both v7x
        # TensorCores get work; cap at the VMEM-safe tile for huge inputs.
        want = _round_up(pl.cdiv(rows, 8), sublanes)
        tile_rows = min(max(want, sublanes), max_tile_rows)

    y2d = _abs_pallas_2d(x2d, tile_rows)
    return y2d.reshape(x.shape)


def ullu_forward(x, bias=None):
    """Pallas implementation of ULLU.forward: |x|. `bias` is unused (as in torch)."""
    del bias  # unused, matches the PyTorch module
    return _ullu_forward_impl(x)


def make_params():
    # Deterministic, matches torch.nn.Parameter(torch.zeros(64), requires_grad=False)
    return {"bias": jnp.zeros((INPUT_LENGTH,), dtype=jnp.float32)}


if __name__ == "__main__":
    params = make_params()
    key = jax.random.PRNGKey(0)

    # Small batch of length-64 vectors, consistent with INPUT_LENGTH.
    x_small = jax.random.normal(key, (8, INPUT_LENGTH), dtype=jnp.float32)
    y_small = jax.block_until_ready(ullu_forward(x_small, params["bias"]))
    assert y_small.shape == x_small.shape and y_small.dtype == x_small.dtype
    assert jnp.allclose(y_small, jnp.abs(x_small)), "mismatch vs reference abs (small)"

    # Larger batch to exercise the multi-block, pipelined, megacore path.
    x_big = jax.random.normal(key, (4096, INPUT_LENGTH), dtype=jnp.float32)
    y_big = jax.block_until_ready(ullu_forward(x_big, params["bias"]))
    assert y_big.shape == x_big.shape and y_big.dtype == x_big.dtype
    assert jnp.allclose(y_big, jnp.abs(x_big)), "mismatch vs reference abs (big)"

    print("KERNEL_OK")
</pallas_src>

<mosaic_0001>
module attributes {stable_mosaic.version = 11 : i64} {
  func.func @_abs_kernel(%arg0: i32, %arg1: memref<4x128xf32, #tpu.memory_space<vmem>>, %arg2: memref<4x128xf32, #tpu.memory_space<vmem>>) attributes {dimension_semantics = [#tpu.dimension_semantics<parallel>], iteration_bounds = array<i64: 1>, scalar_prefetch = 0 : i64, scratch_operands = 0 : i64, tpu.core_type = #tpu.core_type<tc>, window_params = [{transform_indices = @transform_0, window_bounds = array<i64: 4, 128>}, {transform_indices = @transform_1, window_bounds = array<i64: 4, 128>}]} {
    %c0 = arith.constant 0 : index
    %c0_0 = arith.constant 0 : index
    %0 = vector.load %arg1[%c0, %c0_0] : memref<4x128xf32, #tpu.memory_space<vmem>>, vector<4x128xf32>
    %1 = math.absf %0 : vector<4x128xf32>
    %c0_1 = arith.constant 0 : index
    %c0_2 = arith.constant 0 : index
    %2 = vector.load %arg2[%c0_1, %c0_2] : memref<4x128xf32, #tpu.memory_space<vmem>>, vector<4x128xf32>
    tpu.vector_store %arg2[%c0_1, %c0_2], %1 {strides = array<i32>} : memref<4x128xf32, #tpu.memory_space<vmem>>, vector<4x128xf32>,
    return
  }
  func.func @transform_0(%arg0: i32) -> (i32, i32) {
    %c0_i32 = arith.constant 0 : i32
    %c0_i32_0 = arith.constant 0 : i32
    return %arg0, %c0_i32 : i32, i32
  }
  func.func @transform_1(%arg0: i32) -> (i32, i32) {
    %c0_i32 = arith.constant 0 : i32
    %c0_i32_0 = arith.constant 0 : i32
    return %arg0, %c0_i32 : i32, i32
  }
}

</mosaic_0001>

<llo_original>
// kernel: _ullu_forward_impl.1
$region0: #{_ullu_forward_impl.1}
  #allocation0 [shape = 'u32[]', space=smem, size = 0x4, offset = 0x4, fixed_abs, tag = 'smem constant byte address 0x4 - core index']
  #allocation1 [shape = 'u32[144,128]{1,0:T(1,128)}', space=vmem, size = 0x12000, scoped, tag = 'internal scratch']
  %s0 = inlined_call_operand.vmem [shape: f32[4,128], index: 0, kind: input, shape index: {}]
  %s1 = inlined_call_operand.vmem [shape: f32[4,128], index: 1, kind: output, shape index: {}]
  %s2 = sld [smem:[#allocation0]]
  $region14: #{_ullu_forward_impl.1} parent=0
    _
  %s4 = ssub.s32 1, %s2
  %s5 = scalar_select 0, %s4, %s2
  // Predicated region
  $region2: #{_ullu_forward_impl.1} parent=0 // pred_check
    _
  $region3: #{_ullu_forward_impl.1} parent=0 // pred_check_branch
    %7 = sbr.rel (0) target = $region5
  $region4: #{_ullu_forward_impl.1} parent=0 // pred_region
    _
  $region5: #{_ullu_forward_impl.1} parent=0 // pred_fallthru
    _
  %v8 = vld [vmem:[%s0] sm:$0xf]
  %v9 = vand.u32 2147483647, %v8
  %10 = vst [vmem:[%s1] sm:$0xf] %v9
  // Predicated region
  $region6: #{_ullu_forward_impl.1} parent=0 // pred_check
    _
  $region7: #{_ullu_forward_impl.1} parent=0 // pred_check_branch
    %12 = sbr.rel (0) target = $region9
  $region8: #{_ullu_forward_impl.1} parent=0 // pred_region
    _
  $region9: #{_ullu_forward_impl.1} parent=0 // pred_fallthru
    _
  // Predicated region
  $region10: #{_ullu_forward_impl.1} parent=0 // pred_check
    _
  $region11: #{_ullu_forward_impl.1} parent=0 // pred_check_branch
    %14 = sbr.rel (0) target = $region13
  $region12: #{_ullu_forward_impl.1} parent=0 // pred_region
    _
  $region13: #{_ullu_forward_impl.1} parent=0 // pred_fallthru
    _

</llo_original>
